<compile_context>
chip_gen: v5e
topology: v5e:2x2
jax: 0.10.0
libtpu: 0.0.40
codegen_flags: <defaults>
</compile_context>

<pallas_src>
import jax
import jax.numpy as jnp
from jax.experimental import pallas as pl
from jax.experimental.pallas import tpu as pltpu

BN_EPS = 1e-5


def _bn_relu(h, gamma, beta):
    """Training-mode BatchNorm1d + ReLU, folded into one scale/shift pass."""
    mean = jnp.mean(h, axis=0, keepdims=True)
    mean2 = jnp.mean(h * h, axis=0, keepdims=True)
    var = jnp.maximum(mean2 - mean * mean, 0.0)     # biased batch variance, guarded
    inv = jax.lax.rsqrt(var + BN_EPS)               # EUP rsqrt
    scale = gamma * inv
    shift = beta - mean * scale
    return jnp.maximum(h * scale + shift, 0.0)


def _bf16_dot(a, w):
    """bf16 operands on the MXU, f32 accumulation."""
    return jnp.dot(a.astype(jnp.bfloat16), w.astype(jnp.bfloat16),
                   preferred_element_type=jnp.float32)


def _make_kernel(in_channel, n_classes):
    """Builds the gridless kernel with static layer/slab geometry baked in."""

    def kernel(noise_aug_ref, w1_ref, w2_ref, w3_hbm_ref, w4_ref, vecs_ref,
               out_ref, w3_vmem, w3_sem):
        B = noise_aug_ref.shape[0]
        out_dim = out_ref.shape[1]

        # Kick off the largest weight transfer (w3, HBM -> VMEM scratch) right
        # away; it overlaps the embedding / layer-1 / layer-2 compute below.
        w3_copy = pltpu.make_async_copy(w3_hbm_ref, w3_vmem, w3_sem)
        w3_copy.start()

        # In-kernel embedding lookup: one_hot(labels) @ emb (exact, f32).
        # Labels ride along as the last column of the noise slab.
        labels = noise_aug_ref[:, in_channel:in_channel + 1].astype(jnp.int32)
        iota = jax.lax.broadcasted_iota(jnp.int32, (B, n_classes), 1)
        one_hot = (labels == iota).astype(jnp.float32)
        emb = vecs_ref[10:10 + n_classes, 0:n_classes]            # (C, C) f32
        emb_rows = jnp.dot(one_hot, emb,
                           preferred_element_type=jnp.float32)    # (B, C)

        # gen_input = label_emb(labels) * noise
        x = emb_rows * noise_aug_ref[:, 0:in_channel]

        # layer_1: Linear(in_channel, 128)
        h = _bf16_dot(x, w1_ref[...]) + vecs_ref[0:1, 0:128]
        # conv_blocks: BN(128)->ReLU->Linear(128,256)->BN(256)->ReLU
        #              ->Linear(256,512)->BN(512)->ReLU->Linear(512,2)
        h = _bn_relu(h, vecs_ref[1:2, 0:128], vecs_ref[2:3, 0:128])
        h = _bf16_dot(h, w2_ref[...]) + vecs_ref[3:4, 0:256]
        h = _bn_relu(h, vecs_ref[4:5, 0:256], vecs_ref[5:6, 0:256])

        w3_copy.wait()                                # w3 now resident in VMEM
        h = _bf16_dot(h, w3_vmem[...]) + vecs_ref[6:7, :]
        h = _bn_relu(h, vecs_ref[7:8, :], vecs_ref[8:9, :])

        out_ref[...] = _bf16_dot(h, w4_ref[...]) + vecs_ref[9:10, 0:out_dim]

    return kernel


def toy_generator(noise, labels, params):
    """noise: (B, in_channel) f32, labels: (B,) int -> (B, 2) f32."""
    B, in_channel = noise.shape
    n_classes = params["emb"].shape[0]
    assert n_classes == in_channel, (
        "elementwise emb*noise requires n_classes == in_channel "
        f"(got {n_classes} vs {in_channel})")
    out_dim = params["w4"].shape[1]

    # Fold labels into the noise slab as one extra f32 column (exact for
    # small integer class ids) -> one fewer prologue DMA.
    noise_aug = jnp.concatenate(
        [noise.astype(jnp.float32),
         labels.astype(jnp.float32).reshape(B, 1)], axis=1)       # (B, C+1)

    # bf16 weights (f32 accumulation inside the kernel); w4 kept at (512, 2).
    w1 = params["w1"].astype(jnp.bfloat16)
    w2 = params["w2"].astype(jnp.bfloat16)
    w3 = params["w3"].astype(jnp.bfloat16)
    w4 = params["w4"].astype(jnp.bfloat16)

    # Pack the 10 per-layer vectors + the embedding table into one f32 slab.
    width = 512

    def row(v):
        v = v.reshape(1, -1).astype(jnp.float32)
        return jnp.pad(v, ((0, 0), (0, width - v.shape[1])))

    vecs = jnp.concatenate([
        row(params["b1"]), row(params["g1"]), row(params["be1"]),   # rows 0-2
        row(params["b2"]), row(params["g2"]), row(params["be2"]),   # rows 3-5
        row(params["b3"]), row(params["g3"]), row(params["be3"]),   # rows 6-8
        row(params["b4"]),                                          # row 9
        jnp.pad(params["emb"].astype(jnp.float32),                  # rows 10..10+C
                ((0, 0), (0, width - n_classes))),
    ], axis=0)

    kernel = _make_kernel(in_channel, n_classes)
    vmem = pltpu.MemorySpace.VMEM
    return pl.pallas_call(
        kernel,
        out_shape=jax.ShapeDtypeStruct((B, out_dim), jnp.float32),
        in_specs=[pl.BlockSpec(memory_space=vmem),      # noise (+labels col)
                  pl.BlockSpec(memory_space=vmem),      # w1
                  pl.BlockSpec(memory_space=vmem),      # w2
                  pl.BlockSpec(memory_space=pl.ANY),    # w3 stays in HBM
                  pl.BlockSpec(memory_space=vmem),      # w4 (512, 2)
                  pl.BlockSpec(memory_space=vmem)],     # packed vecs slab
        out_specs=pl.BlockSpec(memory_space=vmem),
        scratch_shapes=[pltpu.VMEM(params["w3"].shape, jnp.bfloat16),
                        pltpu.SemaphoreType.DMA(())],
    )(noise_aug, w1, w2, w3, w4, vecs)


def reference_forward(noise, labels, params):
    """Pure-JAX reference in matching (bf16-matmul / f32-BN) precision."""
    n_classes = params["emb"].shape[0]
    one_hot = jax.nn.one_hot(labels, n_classes, dtype=jnp.float32)
    x = (one_hot @ params["emb"]) * noise
    h = _bf16_dot(x, params["w1"]) + params["b1"]
    h = _bn_relu(h, params["g1"], params["be1"])
    h = _bf16_dot(h, params["w2"]) + params["b2"]
    h = _bn_relu(h, params["g2"], params["be2"])
    h = _bf16_dot(h, params["w3"]) + params["b3"]
    h = _bn_relu(h, params["g3"], params["be3"])
    return _bf16_dot(h, params["w4"]) + params["b4"]


if __name__ == "__main__":
    key = jax.random.PRNGKey(0)
    n_classes = 8
    in_channel = 8   # must equal n_classes for the elementwise mul
    batch = 8
    ks = jax.random.split(key, 12)

    def init(k, shape, scale=0.1):
        return (scale * jax.random.normal(k, shape)).astype(jnp.float32)

    params = dict(
        emb=init(ks[0], (n_classes, n_classes), 1.0),   # nn.Embedding(n_classes, n_classes)
        w1=init(ks[1], (in_channel, 128)), b1=init(ks[2], (1, 128)),
        g1=jnp.ones((1, 128), jnp.float32), be1=jnp.zeros((1, 128), jnp.float32),
        w2=init(ks[3], (128, 256)), b2=init(ks[4], (1, 256)),
        g2=jnp.ones((1, 256), jnp.float32), be2=jnp.zeros((1, 256), jnp.float32),
        w3=init(ks[5], (256, 512)), b3=init(ks[6], (1, 512)),
        g3=jnp.ones((1, 512), jnp.float32), be3=jnp.zeros((1, 512), jnp.float32),
        w4=init(ks[7], (512, 2)), b4=init(ks[8], (1, 2)),
    )

    noise = jax.random.normal(ks[9], (batch, in_channel), dtype=jnp.float32)
    labels = jax.random.randint(ks[10], (batch,), 0, n_classes, dtype=jnp.int32)

    # jit so the small packing/cast ops fold into the same executable.
    fwd = jax.jit(lambda n, l: toy_generator(n, l, params))
    out = jax.block_until_ready(fwd(noise, labels))
    assert out.shape == (batch, 2), out.shape

    ref = reference_forward(noise, labels, params)
    assert jnp.allclose(out, ref, atol=2e-3, rtol=2e-3), (out, ref)

    # TODO(synk): PyTorch training-mode BatchNorm1d also updates
    # running_mean/running_var; only the forward output is reproduced here.
    print("KERNEL_OK")
</pallas_src>

<mosaic_0001>
module attributes {stable_mosaic.version = 11 : i64} {
  func.func @kernel(%arg0: memref<8x9xf32, #tpu.memory_space<vmem>>, %arg1: memref<8x128xbf16, #tpu.memory_space<vmem>>, %arg2: memref<128x256xbf16, #tpu.memory_space<vmem>>, %arg3: memref<256x512xbf16, #tpu.memory_space<any>>, %arg4: memref<512x2xbf16, #tpu.memory_space<vmem>>, %arg5: memref<18x512xf32, #tpu.memory_space<vmem>>, %arg6: memref<8x2xf32, #tpu.memory_space<vmem>>, %arg7: memref<256x512xbf16, #tpu.memory_space<vmem>>, %arg8: memref<!tpu.dma_semaphore, #tpu.memory_space<semaphore_mem>>) attributes {dimension_semantics = [], scalar_prefetch = 0 : i64, scratch_operands = 2 : i64, tpu.core_type = #tpu.core_type<tc>} {
    tpu.enqueue_dma source(%arg3 : memref<256x512xbf16, #tpu.memory_space<any>>) target(%arg7 : memref<256x512xbf16, #tpu.memory_space<vmem>>) target_semaphore(%arg8 : memref<!tpu.dma_semaphore, #tpu.memory_space<semaphore_mem>>)
    %c0 = arith.constant 0 : index
    %c8 = arith.constant 8 : index
    %0 = vector.load %arg0[%c0, %c8] : memref<8x9xf32, #tpu.memory_space<vmem>>, vector<8x1xf32>
    %1 = arith.fptosi %0 : vector<8x1xf32> to vector<8x1xi32>
    %2 = tpu.iota {dimensions = array<i32: 1>} : vector<8x8xi32>
    %3 = vector.broadcast %1 : vector<8x1xi32> to vector<8x8xi32>
    %4 = arith.cmpi eq, %3, %2 : vector<8x8xi32>
    %5 = arith.extui %4 : vector<8x8xi1> to vector<8x8xi32>
    %6 = arith.sitofp %5 : vector<8x8xi32> to vector<8x8xf32>
    %c10 = arith.constant 10 : index
    %c0_0 = arith.constant 0 : index
    %7 = vector.load %arg5[%c10, %c0_0] : memref<18x512xf32, #tpu.memory_space<vmem>>, vector<8x8xf32>
    %cst = arith.constant dense<0.000000e+00> : vector<8x8xf32>
    %8 = tpu.matmul %6, %7, %cst {dimension_numbers = #tpu.dot_dimension_numbers<[1], [0], [0], [1], [0, 0, 1, 1], [], []>} : vector<8x8xf32>, vector<8x8xf32>, vector<8x8xf32> -> vector<8x8xf32>
    %c0_1 = arith.constant 0 : index
    %c0_2 = arith.constant 0 : index
    %9 = vector.load %arg0[%c0_1, %c0_2] : memref<8x9xf32, #tpu.memory_space<vmem>>, vector<8x8xf32>
    %10 = arith.mulf %8, %9 : vector<8x8xf32>
    %c0_3 = arith.constant 0 : index
    %c0_4 = arith.constant 0 : index
    %11 = vector.load %arg1[%c0_3, %c0_4] : memref<8x128xbf16, #tpu.memory_space<vmem>>, vector<8x128xbf16>
    %12 = arith.truncf %10 : vector<8x8xf32> to vector<8x8xbf16>
    %cst_5 = arith.constant dense<0.000000e+00> : vector<8x128xf32>
    %13 = tpu.matmul %12, %11, %cst_5 {dimension_numbers = #tpu.dot_dimension_numbers<[1], [0], [0], [1], [0, 0, 1, 1], [], []>} : vector<8x8xbf16>, vector<8x128xbf16>, vector<8x128xf32> -> vector<8x128xf32>
    %c0_6 = arith.constant 0 : index
    %c0_7 = arith.constant 0 : index
    %14 = vector.load %arg5[%c0_6, %c0_7] : memref<18x512xf32, #tpu.memory_space<vmem>>, vector<1x128xf32>
    %15 = vector.broadcast %14 : vector<1x128xf32> to vector<8x128xf32>
    %16 = arith.addf %13, %15 : vector<8x128xf32>
    %c1 = arith.constant 1 : index
    %c0_8 = arith.constant 0 : index
    %17 = vector.load %arg5[%c1, %c0_8] : memref<18x512xf32, #tpu.memory_space<vmem>>, vector<1x128xf32>
    %c2 = arith.constant 2 : index
    %c0_9 = arith.constant 0 : index
    %18 = vector.load %arg5[%c2, %c0_9] : memref<18x512xf32, #tpu.memory_space<vmem>>, vector<1x128xf32>
    %cst_10 = arith.constant dense<0.000000e+00> : vector<128xf32>
    %19 = vector.multi_reduction <add>, %16, %cst_10 [0] : vector<8x128xf32> to vector<128xf32>
    %20 = vector.shape_cast %19 : vector<128xf32> to vector<1x128xf32>
    %cst_11 = arith.constant 8.000000e+00 : f32
    %21 = vector.broadcast %cst_11 : f32 to vector<1x128xf32>
    %22 = arith.divf %20, %21 : vector<1x128xf32>
    %23 = arith.mulf %16, %16 : vector<8x128xf32>
    %cst_12 = arith.constant dense<0.000000e+00> : vector<128xf32>
    %24 = vector.multi_reduction <add>, %23, %cst_12 [0] : vector<8x128xf32> to vector<128xf32>
    %25 = vector.shape_cast %24 : vector<128xf32> to vector<1x128xf32>
    %cst_13 = arith.constant 8.000000e+00 : f32
    %26 = vector.broadcast %cst_13 : f32 to vector<1x128xf32>
    %27 = arith.divf %25, %26 : vector<1x128xf32>
    %28 = arith.mulf %22, %22 : vector<1x128xf32>
    %29 = arith.subf %27, %28 : vector<1x128xf32>
    %cst_14 = arith.constant 0.000000e+00 : f32
    %30 = vector.broadcast %cst_14 : f32 to vector<1x128xf32>
    %31 = arith.maximumf %29, %30 : vector<1x128xf32>
    %cst_15 = arith.constant 9.99999974E-6 : f32
    %32 = vector.broadcast %cst_15 : f32 to vector<1x128xf32>
    %33 = arith.addf %31, %32 : vector<1x128xf32>
    %34 = math.rsqrt %33 : vector<1x128xf32>
    %35 = arith.mulf %17, %34 : vector<1x128xf32>
    %36 = arith.mulf %22, %35 : vector<1x128xf32>
    %37 = arith.subf %18, %36 : vector<1x128xf32>
    %38 = vector.broadcast %35 : vector<1x128xf32> to vector<8x128xf32>
    %39 = arith.mulf %16, %38 : vector<8x128xf32>
    %40 = vector.broadcast %37 : vector<1x128xf32> to vector<8x128xf32>
    %41 = arith.addf %39, %40 : vector<8x128xf32>
    %cst_16 = arith.constant 0.000000e+00 : f32
    %42 = vector.broadcast %cst_16 : f32 to vector<8x128xf32>
    %43 = arith.maximumf %41, %42 : vector<8x128xf32>
    %c0_17 = arith.constant 0 : index
    %c0_18 = arith.constant 0 : index
    %44 = vector.load %arg2[%c0_17, %c0_18] : memref<128x256xbf16, #tpu.memory_space<vmem>>, vector<128x256xbf16>
    %45 = arith.truncf %43 : vector<8x128xf32> to vector<8x128xbf16>
    %cst_19 = arith.constant dense<0.000000e+00> : vector<8x256xf32>
    %46 = tpu.matmul %45, %44, %cst_19 {dimension_numbers = #tpu.dot_dimension_numbers<[1], [0], [0], [1], [0, 0, 1, 1], [], []>} : vector<8x128xbf16>, vector<128x256xbf16>, vector<8x256xf32> -> vector<8x256xf32>
    %c3 = arith.constant 3 : index
    %c0_20 = arith.constant 0 : index
    %47 = vector.load %arg5[%c3, %c0_20] : memref<18x512xf32, #tpu.memory_space<vmem>>, vector<1x256xf32>
    %48 = vector.broadcast %47 : vector<1x256xf32> to vector<8x256xf32>
    %49 = arith.addf %46, %48 : vector<8x256xf32>
    %c4 = arith.constant 4 : index
    %c0_21 = arith.constant 0 : index
    %50 = vector.load %arg5[%c4, %c0_21] : memref<18x512xf32, #tpu.memory_space<vmem>>, vector<1x256xf32>
    %c5 = arith.constant 5 : index
    %c0_22 = arith.constant 0 : index
    %51 = vector.load %arg5[%c5, %c0_22] : memref<18x512xf32, #tpu.memory_space<vmem>>, vector<1x256xf32>
    %cst_23 = arith.constant dense<0.000000e+00> : vector<256xf32>
    %52 = vector.multi_reduction <add>, %49, %cst_23 [0] : vector<8x256xf32> to vector<256xf32>
    %53 = vector.shape_cast %52 : vector<256xf32> to vector<1x256xf32>
    %cst_24 = arith.constant 8.000000e+00 : f32
    %54 = vector.broadcast %cst_24 : f32 to vector<1x256xf32>
    %55 = arith.divf %53, %54 : vector<1x256xf32>
    %56 = arith.mulf %49, %49 : vector<8x256xf32>
    %cst_25 = arith.constant dense<0.000000e+00> : vector<256xf32>
    %57 = vector.multi_reduction <add>, %56, %cst_25 [0] : vector<8x256xf32> to vector<256xf32>
    %58 = vector.shape_cast %57 : vector<256xf32> to vector<1x256xf32>
    %cst_26 = arith.constant 8.000000e+00 : f32
    %59 = vector.broadcast %cst_26 : f32 to vector<1x256xf32>
    %60 = arith.divf %58, %59 : vector<1x256xf32>
    %61 = arith.mulf %55, %55 : vector<1x256xf32>
    %62 = arith.subf %60, %61 : vector<1x256xf32>
    %cst_27 = arith.constant 0.000000e+00 : f32
    %63 = vector.broadcast %cst_27 : f32 to vector<1x256xf32>
    %64 = arith.maximumf %62, %63 : vector<1x256xf32>
    %cst_28 = arith.constant 9.99999974E-6 : f32
    %65 = vector.broadcast %cst_28 : f32 to vector<1x256xf32>
    %66 = arith.addf %64, %65 : vector<1x256xf32>
    %67 = math.rsqrt %66 : vector<1x256xf32>
    %68 = arith.mulf %50, %67 : vector<1x256xf32>
    %69 = arith.mulf %55, %68 : vector<1x256xf32>
    %70 = arith.subf %51, %69 : vector<1x256xf32>
    %71 = vector.broadcast %68 : vector<1x256xf32> to vector<8x256xf32>
    %72 = arith.mulf %49, %71 : vector<8x256xf32>
    %73 = vector.broadcast %70 : vector<1x256xf32> to vector<8x256xf32>
    %74 = arith.addf %72, %73 : vector<8x256xf32>
    %cst_29 = arith.constant 0.000000e+00 : f32
    %75 = vector.broadcast %cst_29 : f32 to vector<8x256xf32>
    %76 = arith.maximumf %74, %75 : vector<8x256xf32>
    tpu.wait_dma2 semaphore(%arg8 : memref<!tpu.dma_semaphore, #tpu.memory_space<semaphore_mem>>) src(%arg3 : memref<256x512xbf16, #tpu.memory_space<any>>) dst(%arg7 : memref<256x512xbf16, #tpu.memory_space<vmem>>)
    %c0_30 = arith.constant 0 : index
    %c0_31 = arith.constant 0 : index
    %77 = vector.load %arg7[%c0_30, %c0_31] : memref<256x512xbf16, #tpu.memory_space<vmem>>, vector<256x512xbf16>
    %78 = arith.truncf %76 : vector<8x256xf32> to vector<8x256xbf16>
    %cst_32 = arith.constant dense<0.000000e+00> : vector<8x512xf32>
    %79 = tpu.matmul %78, %77, %cst_32 {dimension_numbers = #tpu.dot_dimension_numbers<[1], [0], [0], [1], [0, 0, 1, 1], [], []>} : vector<8x256xbf16>, vector<256x512xbf16>, vector<8x512xf32> -> vector<8x512xf32>
    %c6 = arith.constant 6 : index
    %c0_33 = arith.constant 0 : index
    %80 = vector.load %arg5[%c6, %c0_33] : memref<18x512xf32, #tpu.memory_space<vmem>>, vector<1x512xf32>
    %81 = vector.broadcast %80 : vector<1x512xf32> to vector<8x512xf32>
    %82 = arith.addf %79, %81 : vector<8x512xf32>
    %c7 = arith.constant 7 : index
    %c0_34 = arith.constant 0 : index
    %83 = vector.load %arg5[%c7, %c0_34] : memref<18x512xf32, #tpu.memory_space<vmem>>, vector<1x512xf32>
    %c8_35 = arith.constant 8 : index
    %c0_36 = arith.constant 0 : index
    %84 = vector.load %arg5[%c8_35, %c0_36] : memref<18x512xf32, #tpu.memory_space<vmem>>, vector<1x512xf32>
    %cst_37 = arith.constant dense<0.000000e+00> : vector<512xf32>
    %85 = vector.multi_reduction <add>, %82, %cst_37 [0] : vector<8x512xf32> to vector<512xf32>
    %86 = vector.shape_cast %85 : vector<512xf32> to vector<1x512xf32>
    %cst_38 = arith.constant 8.000000e+00 : f32
    %87 = vector.broadcast %cst_38 : f32 to vector<1x512xf32>
    %88 = arith.divf %86, %87 : vector<1x512xf32>
    %89 = arith.mulf %82, %82 : vector<8x512xf32>
    %cst_39 = arith.constant dense<0.000000e+00> : vector<512xf32>
    %90 = vector.multi_reduction <add>, %89, %cst_39 [0] : vector<8x512xf32> to vector<512xf32>
    %91 = vector.shape_cast %90 : vector<512xf32> to vector<1x512xf32>
    %cst_40 = arith.constant 8.000000e+00 : f32
    %92 = vector.broadcast %cst_40 : f32 to vector<1x512xf32>
    %93 = arith.divf %91, %92 : vector<1x512xf32>
    %94 = arith.mulf %88, %88 : vector<1x512xf32>
    %95 = arith.subf %93, %94 : vector<1x512xf32>
    %cst_41 = arith.constant 0.000000e+00 : f32
    %96 = vector.broadcast %cst_41 : f32 to vector<1x512xf32>
    %97 = arith.maximumf %95, %96 : vector<1x512xf32>
    %cst_42 = arith.constant 9.99999974E-6 : f32
    %98 = vector.broadcast %cst_42 : f32 to vector<1x512xf32>
    %99 = arith.addf %97, %98 : vector<1x512xf32>
    %100 = math.rsqrt %99 : vector<1x512xf32>
    %101 = arith.mulf %83, %100 : vector<1x512xf32>
    %102 = arith.mulf %88, %101 : vector<1x512xf32>
    %103 = arith.subf %84, %102 : vector<1x512xf32>
    %104 = vector.broadcast %101 : vector<1x512xf32> to vector<8x512xf32>
    %105 = arith.mulf %82, %104 : vector<8x512xf32>
    %106 = vector.broadcast %103 : vector<1x512xf32> to vector<8x512xf32>
    %107 = arith.addf %105, %106 : vector<8x512xf32>
    %cst_43 = arith.constant 0.000000e+00 : f32
    %108 = vector.broadcast %cst_43 : f32 to vector<8x512xf32>
    %109 = arith.maximumf %107, %108 : vector<8x512xf32>
    %c0_44 = arith.constant 0 : index
    %c0_45 = arith.constant 0 : index
    %110 = vector.load %arg4[%c0_44, %c0_45] : memref<512x2xbf16, #tpu.memory_space<vmem>>, vector<512x2xbf16>
    %111 = arith.truncf %109 : vector<8x512xf32> to vector<8x512xbf16>
    %cst_46 = arith.constant dense<0.000000e+00> : vector<8x2xf32>
    %112 = tpu.matmul %111, %110, %cst_46 {dimension_numbers = #tpu.dot_dimension_numbers<[1], [0], [0], [1], [0, 0, 1, 1], [], []>} : vector<8x512xbf16>, vector<512x2xbf16>, vector<8x2xf32> -> vector<8x2xf32>
    %c9 = arith.constant 9 : index
    %c0_47 = arith.constant 0 : index
    %113 = vector.load %arg5[%c9, %c0_47] : memref<18x512xf32, #tpu.memory_space<vmem>>, vector<1x2xf32>
    %114 = vector.broadcast %113 : vector<1x2xf32> to vector<8x2xf32>
    %115 = arith.addf %112, %114 : vector<8x2xf32>
    %c0_48 = arith.constant 0 : index
    %c0_49 = arith.constant 0 : index
    %116 = vector.load %arg6[%c0_48, %c0_49] : memref<8x2xf32, #tpu.memory_space<vmem>>, vector<8x2xf32>
    tpu.vector_store %arg6[%c0_48, %c0_49], %115 {strides = array<i32>} : memref<8x2xf32, #tpu.memory_space<vmem>>, vector<8x2xf32>,
    return
  }
}

</mosaic_0001>

<llo_original>
// kernel: _lambda_.1
$region0: #{_lambda_.1}
  #allocation0 [shape = 'u32[]', space=smem, size = 0x4, offset = 0x4, fixed_abs, tag = 'smem constant byte address 0x4 - core index']
  #allocation1 [shape = 'u32[72,128]{1,0:T(1,128)}', space=vmem, size = 0x9000, scoped, tag = 'internal scratch']
  #allocation2 [shape = 'bf16[256,512]{1,0:T(8,128)(2,1)}', space=vmem, size = 0x40000, scoped, tag = 'scratch operand']
  #allocation3 [shape = 's32[1]{0}', space=sflag, size = 0x4, scoped, tag = 'scratch operand']
  #allocation6 [shape = 's32[]', space=sflag, size = 0x4, offset = 0, fixed_abs, tag = 'sflag constant byte address 0x0 - dummy sync flag']
  #allocation7 [shape = 's32[]', space=sflag, size = 0x4, offset = 0, fixed_abs, tag = 'sflag constant byte address 0x0 - dummy sync flag']
  #allocation8 [shape = 'u32[]', space=smem, size = 0x4, offset = 0x44, fixed_abs, tag = 'smem constant byte address 0x44 - assertion arg 0']
  #allocation9 [shape = 'u32[]', space=smem, size = 0x4, offset = 0x48, fixed_abs, tag = 'smem constant byte address 0x48 - assertion arg 1']
  %s0 = inlined_call_operand.vmem [shape: f32[8,9], index: 0, kind: input, shape index: {}]
  %s1 = inlined_call_operand.vmem [shape: bf16[8,128], index: 1, kind: input, shape index: {}]
  %s2 = inlined_call_operand.vmem [shape: bf16[128,256], index: 2, kind: input, shape index: {}]
  %s3 = inlined_call_operand.hbm [shape: bf16[256,512], index: 3, kind: input, shape index: {}]
  %s4 = inlined_call_operand.hbm [shape: bf16[512,2], index: 4, kind: input, shape index: {}]
  %s5 = inlined_call_operand.vmem [shape: f32[18,512], index: 5, kind: input, shape index: {}]
  %s6 = inlined_call_operand.vmem [shape: f32[8,2], index: 6, kind: output, shape index: {}]
  %s7 = sld [smem:[#allocation0]]
  $region38: #{_lambda_.1} parent=0
    _
  %s9 = ssub.s32 1, %s7
  %s10 = scalar_select 0, %s9, %s7
  $region1: #{_lambda_.1} parent=0
    #allocation4 [shape = 'u8[131072]{0}', space=vmem, size = 0x20000, scoped, tag = 'input window, operand 4, single buffered']
    #allocation5 [shape = 's32[1]{0}', space=sflag, size = 0x4, scoped, tag = 'scoped memory for _lambda_.1']
    %11 = vsyncpa [#allocation5], 0
    // Predicated region
    $region2: #{_lambda_.1} parent=1 // pred_check
      _
    $region3: #{_lambda_.1} parent=1 // pred_check_branch
      %13 = sbr.rel (0) target = $region5
    $region4: #{_lambda_.1} parent=1 // pred_region
      _
    $region5: #{_lambda_.1} parent=1 // pred_fallthru
      _
    // Predicated region
    $region6: #{_lambda_.1} parent=1 // pred_check
      _
    $region7: #{_lambda_.1} parent=1 // pred_check_branch
      %15 = sbr.rel (0) target = $region9
    $region8: #{_lambda_.1} parent=1 // pred_region
      _
    $region9: #{_lambda_.1} parent=1 // pred_fallthru
      _
    // Predicated region
    $region10: #{_lambda_.1} parent=1 // pred_check
      _
    $region11: #{_lambda_.1} parent=1 // pred_check_branch
      %17 = sbr.rel (0) target = $region13
    $region12: #{_lambda_.1} parent=1 // pred_region
      _
    $region13: #{_lambda_.1} parent=1 // pred_fallthru
      _
    // Predicated region
    $region14: #{_lambda_.1} parent=1 // pred_check
      _
    $region15: #{_lambda_.1} parent=1 // pred_check_branch
      %19 = sbr.rel (0) target = $region17
    $region16: #{_lambda_.1} parent=1 // pred_region
      %21 = vsyncadd [#allocation5], 0
      %s22 = sshll.u32 %s4, 4
      %s23 = int_to_ptr.hbm [resolvable:$true] %s22
      %s24 = sshll.u32 [#allocation4], 4
      %s25 = int_to_ptr.vmem [resolvable:$true] %s24
      %30 = dma.hbm_to_vmem [thread:$0]  %s23, 4096, %s25, [#allocation5], 64, 64, 4
    $region17: #{_lambda_.1} parent=1 // pred_fallthru
      _
    // Predicated region
    $region18: #{_lambda_.1} parent=1 // pred_check
      _
    $region19: #{_lambda_.1} parent=1 // pred_check_branch
      %32 = sbr.rel (0) target = $region21
    $region20: #{_lambda_.1} parent=1 // pred_region
      _
    $region21: #{_lambda_.1} parent=1 // pred_fallthru
      _
    // Predicated region
    $region22: #{_lambda_.1} parent=1 // pred_check
      _
    $region23: #{_lambda_.1} parent=1 // pred_check_branch
      %34 = sbr.rel (0) target = $region25
    $region24: #{_lambda_.1} parent=1 // pred_region
      %36 = dma.done [#allocation5], 4096
    $region25: #{_lambda_.1} parent=1 // pred_fallthru
      _
    // Predicated region
    $region26: #{_lambda_.1} parent=1 // pred_check
      _
    $region27: #{_lambda_.1} parent=1 // pred_check_branch
      %39 = sbr.rel target = $region29
    $region28: #{_lambda_.1} parent=1 // pred_region
      %40 = sst [smem:[#allocation8]] [#allocation7]
      %41 = sst [smem:[#allocation9]] [#allocation6]
    $region29: #{_lambda_.1} parent=1 // pred_fallthru
      _
    %43 = shalt.err (0)
    %s45 = sshll.u32 %s3, 4
    %s46 = int_to_ptr.hbm [resolvable:$true] %s45
    %s47 = sshll.u32 [#allocation2], 4
    %s48 = int_to_ptr.vmem [resolvable:$true] %s47
    %50 = dma.hbm_to_vmem [thread:$0]  %s46, 8192, %s48, [#allocation3]
    %v51 = vld [vmem:[%s0] sm:$0xff]
    %v52 = vcvt.f32.s32.to.zero.pseudo %v51
    %v53 = vlaneseq
    %v54 = vand.u32 %v53, 127
    %55 = vset.pattern.permute.xlu0 8
    %56 = vperm.xlu0 %55, %v52
    %v57 = vpop.permute.xlu0 %56
    %vm58 = vcmp.eq.s32.totalorder %v57, %v54
    %v59 = vsel %vm58, 1, 0
    %v60 = vcvt.s32.f32 %v59
    %v61 = vld [vmem:[%s5 + $0x20] sm:$0xfc]
    %v62 = vld [vmem:[%s5 + $0x40] sm:$0x3]
    %vm65 = vcmask 1045504
    %v66 = vrot.slane %v61, 2
    %v67 = vrot.slane %v62, 2
    %v68 = vsel %vm65, %v66, %v67
    %vm70 = vcmask 64512
    %v72 = vsel %vm70, %v60, 0
    %74 = vmatpush.msra.mxu0 0.0
    %75 = vmatpush.msra.mxu0 0.0
    %76 = vmatpush.msra.mxu0 0.0
    %77 = vmatpush.msra.mxu0 0.0
    %78 = vmatpush.msra.mxu0 0.0
    %79 = vmatpush.msra.mxu0 0.0
    %80 = vmatpush.msra.mxu0 0.0
    %81 = vmatpush.msra.mxu0 0.0
    %82 = vmatpush.msra.mxu0 0.0
    %83 = vmatpush.msra.mxu0 0.0
    %84 = vmatpush.msra.mxu0 0.0
    %85 = vmatpush.msra.mxu0 0.0
    %86 = vmatpush.msra.mxu0 0.0
    %87 = vmatpush.msra.mxu0 0.0
    %88 = vmatpush.msra.mxu0 0.0
    %89 = vmatpush.msra.mxu0 %v68
    %90 = vmatmul.f32.gmra.mxu0 %v72
    %v91 = vpop.f32.mrf.mxu0
    %v92 = vadd.f32 0.0, %v91
    %93 = vdwg.mxu0
    %v94 = vmul.f32 %v92, %v51
    %v95 = vld [vmem:[%s1] sm:$0xf]
    %v96 = vpack.c.bf16 %v94, %v94
    %v97 = vld [vmem:[%s5] ss:$0 sm:$0xff]
    %v99 = vsel %vm70, %v96, 0
    %vm101 = vcmask 1043456
    %v103 = vsel %vm101, %v95, 0
    %105 = vmatpush.bf16.msra.mxu0 0
    %106 = vmatpush.bf16.msra.mxu0 0
    %107 = vmatpush.bf16.msra.mxu0 0
    %108 = vmatpush.bf16.msra.mxu0 0
    %109 = vmatpush.bf16.msra.mxu0 0
    %110 = vmatpush.bf16.msra.mxu0 0
    %111 = vmatpush.bf16.msra.mxu0 0
    %112 = vmatpush.bf16.msra.mxu0 %v103
    %113 = vmatmul.bf16.gmra.mxu0 %v99
    %v114 = vpop.f32.mrf.mxu0
    %v115 = vadd.f32 %v97, %v114
    %v116 = vpop.f32.mrf.mxu0
    %117 = vdwg.mxu0
    %v118 = vld [vmem:[%s5 + $0x1] ss:$0 sm:$0xff]
    %v119 = vld [vmem:[%s5 + $0x2] ss:$0 sm:$0xff]
    %v120 = vrot.slane %v115, 4
    %v121 = vadd.f32 %v115, %v120
    %v122 = vrot.slane %v121, 2
    %v123 = vadd.f32 %v121, %v122
    %v124 = vrot.slane %v123, 1
    %v125 = vadd.f32 %v123, %v124
    %v126 = vrcp.pop 8.0
    %v127 = vmul.f32 8.0, %v126
    %v128 = vsub.f32 1.0, %v127
    %v129 = vmul.f32 %v126, %v128
    %v130 = vadd.f32 %v126, %v129
    %vm131 = vweird.f32 %v126
    %v132 = vsel %vm131, %v126, %v130
    %v133 = vmul.f32 %v125, %v132
    %v134 = vmul.f32 %v115, %v115
    %v135 = vrot.slane %v134, 4
    %v136 = vadd.f32 %v134, %v135
    %v137 = vrot.slane %v136, 2
    %v138 = vadd.f32 %v136, %v137
    %v139 = vrot.slane %v138, 1
    %v140 = vadd.f32 %v138, %v139
    %v141 = vmul.f32 %v140, %v132
    %v142 = vmul.f32 %v133, %v133
    %v143 = vsub.f32 %v141, %v142
    %v144 = vmax.f32 %v143, 0.0
    %v145 = vadd.f32 %v144, 1e-05
    %v146 = vrsqrt.pop %v145
    %v147 = vmul.f32 %v146, %v145
    %v148 = vmul.f32 %v147, %v146
    %v149 = vmul.f32 0.5, %v148
    %v150 = vsub.f32 1.5, %v149
    %v151 = vmul.f32 %v146, %v150
    %vm152 = vweird.f32 %v145
    %vm153 = vweird.f32 %v146
    %vm154 = vmor %vm152, %vm153
    %v155 = vsel %vm154, %v146, %v151
    %v156 = vmul.f32 %v118, %v155
    %v157 = vmul.f32 %v133, %v156
    %v158 = vsub.f32 %v119, %v157
    %v159 = vmul.f32 %v115, %v156
    %v160 = vadd.f32 %v159, %v158
    %v161 = vmax.f32 %v160, 0.0
    %v162 = vld [vmem:[%s2] sm:$0xff]
    %v163 = vld [vmem:[%s2 + $0x8] sm:$0xff]
    %v164 = vld [vmem:[%s2 + $0x10] sm:$0xff]
    %v165 = vld [vmem:[%s2 + $0x18] sm:$0xff]
    %v166 = vld [vmem:[%s2 + $0x20] sm:$0xff]
    %v167 = vld [vmem:[%s2 + $0x28] sm:$0xff]
    %v168 = vld [vmem:[%s2 + $0x30] sm:$0xff]
    %v169 = vld [vmem:[%s2 + $0x38] sm:$0xff]
    %v170 = vld [vmem:[%s2 + $0x40] sm:$0xff]
    %v171 = vld [vmem:[%s2 + $0x48] sm:$0xff]
    %v172 = vld [vmem:[%s2 + $0x50] sm:$0xff]
    %v173 = vld [vmem:[%s2 + $0x58] sm:$0xff]
    %v174 = vld [vmem:[%s2 + $0x60] sm:$0xff]
    %v175 = vld [vmem:[%s2 + $0x68] sm:$0xff]
    %v176 = vld [vmem:[%s2 + $0x70] sm:$0xff]
    %v177 = vld [vmem:[%s2 + $0x78] sm:$0xff]
    %v178 = vpack.c.bf16 %v161, %v161
    %s179 = scalar_lea.vmem %s5, 3
    %v180 = vld [vmem:[%s179] ss:$8 sm:$0x3]
    %v182 = vperm.slane %v180, 0
    %v183 = vperm.slane %v180, 1
    %v202 = vunpack.c.l.b16 %v162
    %v203 = vunpack.c.h.b16 %v162
    %v204 = vunpack.c.l.b16 %v163
    %v205 = vunpack.c.h.b16 %v163
    %v206 = vunpack.c.l.b16 %v164
    %v207 = vunpack.c.h.b16 %v164
    %v208 = vunpack.c.l.b16 %v165
    %v209 = vunpack.c.h.b16 %v165
    %v210 = vunpack.c.l.b16 %v166
    %v211 = vunpack.c.h.b16 %v166
    %v212 = vunpack.c.l.b16 %v167
    %v213 = vunpack.c.h.b16 %v167
    %v214 = vunpack.c.l.b16 %v168
    %v215 = vunpack.c.h.b16 %v168
    %v216 = vunpack.c.l.b16 %v169
    %v217 = vunpack.c.h.b16 %v169
    %v218 = vunpack.c.l.b16 %v170
    %v219 = vunpack.c.h.b16 %v170
    %v220 = vunpack.c.l.b16 %v171
    %v221 = vunpack.c.h.b16 %v171
    %v222 = vunpack.c.l.b16 %v172
    %v223 = vunpack.c.h.b16 %v172
    %v224 = vunpack.c.l.b16 %v173
    %v225 = vunpack.c.h.b16 %v173
    %v226 = vunpack.c.l.b16 %v174
    %v227 = vunpack.c.h.b16 %v174
    %v228 = vunpack.c.l.b16 %v175
    %v229 = vunpack.c.h.b16 %v175
    %v230 = vunpack.c.l.b16 %v176
    %v231 = vunpack.c.h.b16 %v176
    %v232 = vunpack.c.l.b16 %v177
    %v233 = vunpack.c.h.b16 %v177
    %v234 = vpack.c.b16 %v204, %v202
    %v235 = vpack.c.b16 %v205, %v203
    %v236 = vpack.c.b16 %v208, %v206
    %v237 = vpack.c.b16 %v209, %v207
    %v238 = vpack.c.b16 %v212, %v210
    %v239 = vpack.c.b16 %v213, %v211
    %v240 = vpack.c.b16 %v216, %v214
    %v241 = vpack.c.b16 %v217, %v215
    %v242 = vpack.c.b16 %v220, %v218
    %v243 = vpack.c.b16 %v221, %v219
    %v244 = vpack.c.b16 %v224, %v222
    %v245 = vpack.c.b16 %v225, %v223
    %v246 = vpack.c.b16 %v228, %v226
    %v247 = vpack.c.b16 %v229, %v227
    %v248 = vpack.c.b16 %v232, %v230
    %v249 = vpack.c.b16 %v233, %v231
    %266 = vmatpush.bf16.msra.mxu0 %v248
    %267 = vmatpush.bf16.msra.mxu0 %v246
    %268 = vmatpush.bf16.msra.mxu0 %v244
    %269 = vmatpush.bf16.msra.mxu0 %v242
    %270 = vmatpush.bf16.msra.mxu0 %v240
    %271 = vmatpush.bf16.msra.mxu0 %v238
    %272 = vmatpush.bf16.msra.mxu0 %v236
    %273 = vmatpush.bf16.msra.mxu0 %v234
    %274 = vmatmul.bf16.gmra.mxu0 %v178
    %v275 = vpop.f32.mrf.mxu0
    %v276 = vadd.f32 %v182, %v275
    %v277 = vpop.f32.mrf.mxu0
    %278 = vdwg.mxu0
    %279 = vmatpush.bf16.msra.mxu0 %v249
    %280 = vmatpush.bf16.msra.mxu0 %v247
    %281 = vmatpush.bf16.msra.mxu0 %v245
    %282 = vmatpush.bf16.msra.mxu0 %v243
    %283 = vmatpush.bf16.msra.mxu0 %v241
    %284 = vmatpush.bf16.msra.mxu0 %v239
    %285 = vmatpush.bf16.msra.mxu0 %v237
    %286 = vmatpush.bf16.msra.mxu0 %v235
    %287 = vmatmul.bf16.gmra.mxu0 %v178
    %v288 = vpop.f32.mrf.mxu0
    %v289 = vadd.f32 %v183, %v288
    %v290 = vpop.f32.mrf.mxu0
    %291 = vdwg.mxu0
    %s292 = scalar_lea.vmem %s5, 4
    %v293 = vld [vmem:[%s292] ss:$8 sm:$0x3]
    %s294 = scalar_lea.vmem %s5, 5
    %v295 = vld [vmem:[%s294] ss:$8 sm:$0x3]
    %v296 = vrot.slane %v276, 4
    %v297 = vadd.f32 %v276, %v296
    %v298 = vrot.slane %v297, 2
    %v299 = vadd.f32 %v297, %v298
    %v300 = vrot.slane %v299, 1
    %v301 = vadd.f32 %v299, %v300
    %v302 = vrot.slane %v289, 4
    %v303 = vadd.f32 %v289, %v302
    %v304 = vrot.slane %v303, 2
    %v305 = vadd.f32 %v303, %v304
    %v306 = vrot.slane %v305, 1
    %v307 = vadd.f32 %v305, %v306
    %v308 = vmul.f32 %v301, %v132
    %v309 = vmul.f32 %v307, %v132
    %v310 = vmul.f32 %v276, %v276
    %v311 = vmul.f32 %v289, %v289
    %v312 = vrot.slane %v310, 4
    %v313 = vadd.f32 %v310, %v312
    %v314 = vrot.slane %v313, 2
    %v315 = vadd.f32 %v313, %v314
    %v316 = vrot.slane %v315, 1
    %v317 = vadd.f32 %v315, %v316
    %v318 = vrot.slane %v311, 4
    %v319 = vadd.f32 %v311, %v318
    %v320 = vrot.slane %v319, 2
    %v321 = vadd.f32 %v319, %v320
    %v322 = vrot.slane %v321, 1
    %v323 = vadd.f32 %v321, %v322
    %v324 = vmul.f32 %v317, %v132
    %v325 = vmul.f32 %v323, %v132
    %v326 = vmul.f32 %v308, %v308
    %v327 = vmul.f32 %v309, %v309
    %v328 = vsub.f32 %v324, %v326
    %v329 = vsub.f32 %v325, %v327
    %v330 = vmax.f32 %v328, 0.0
    %v331 = vmax.f32 %v329, 0.0
    %v332 = vadd.f32 %v330, 1e-05
    %v333 = vadd.f32 %v331, 1e-05
    %v334 = vrsqrt.pop %v332
    %v335 = vmul.f32 %v334, %v332
    %v336 = vmul.f32 %v335, %v334
    %v337 = vmul.f32 0.5, %v336
    %v338 = vsub.f32 1.5, %v337
    %v339 = vmul.f32 %v334, %v338
    %vm340 = vweird.f32 %v332
    %vm341 = vweird.f32 %v334
    %vm342 = vmor %vm340, %vm341
    %v343 = vsel %vm342, %v334, %v339
    %v344 = vrsqrt.pop %v333
    %v345 = vmul.f32 %v344, %v333
    %v346 = vmul.f32 %v345, %v344
    %v347 = vmul.f32 0.5, %v346
    %v348 = vsub.f32 1.5, %v347
    %v349 = vmul.f32 %v344, %v348
    %vm350 = vweird.f32 %v333
    %vm351 = vweird.f32 %v344
    %vm352 = vmor %vm350, %vm351
    %v353 = vsel %vm352, %v344, %v349
    %v356 = vrot.slane %v353, 7
    %vm357 = vcmask 1040384
    %v358 = vsel %vm357, %v343, %v356
    %v360 = vmul.f32 %v293, %v358
    %v362 = vperm.slane %v360, 0
    %v363 = vperm.slane %v360, 1
    %v366 = vmul.f32 %v308, %v362
    %v367 = vmul.f32 %v309, %v363
    %v370 = vrot.slane %v367, 7
    %v371 = vsel %vm357, %v366, %v370
    %v373 = vsub.f32 %v295, %v371
    %v374 = vmul.f32 %v276, %v362
    %v375 = vmul.f32 %v289, %v363
    %v377 = vperm.slane %v373, 0
    %v378 = vperm.slane %v373, 1
    %v381 = vadd.f32 %v374, %v377
    %v382 = vadd.f32 %v375, %v378
    %v383 = vmax.f32 %v381, 0.0
    %v384 = vmax.f32 %v382, 0.0
    %s385 = smul.u32 4, 32
    %s386 = smul.u32 %s385, 4
    %s387 = sshll.u32 %s386, 4
    %388 = dma.done [#allocation3], %s387
    %v389 = vld [vmem:[#allocation2] sm:$0xff]
    %v390 = vld [vmem:[#allocation2 + $0x8] sm:$0xff]
    %v391 = vld [vmem:[#allocation2 + $0x10] sm:$0xff]
    %v392 = vld [vmem:[#allocation2 + $0x18] sm:$0xff]
    %v393 = vld [vmem:[#allocation2 + $0x20] sm:$0xff]
    %v394 = vld [vmem:[#allocation2 + $0x28] sm:$0xff]
    %v395 = vld [vmem:[#allocation2 + $0x30] sm:$0xff]
    %v396 = vld [vmem:[#allocation2 + $0x38] sm:$0xff]
    %v397 = vld [vmem:[#allocation2 + $0x40] sm:$0xff]
    %v398 = vld [vmem:[#allocation2 + $0x48] sm:$0xff]
    %v399 = vld [vmem:[#allocation2 + $0x50] sm:$0xff]
    %v400 = vld [vmem:[#allocation2 + $0x58] sm:$0xff]
    %v401 = vld [vmem:[#allocation2 + $0x60] sm:$0xff]
    %v402 = vld [vmem:[#allocation2 + $0x68] sm:$0xff]
    %v403 = vld [vmem:[#allocation2 + $0x70] sm:$0xff]
    %v404 = vld [vmem:[#allocation2 + $0x78] sm:$0xff]
    %v405 = vld [vmem:[#allocation2 + $0x80] sm:$0xff]
    %v406 = vld [vmem:[#allocation2 + $0x88] sm:$0xff]
    %v407 = vld [vmem:[#allocation2 + $0x90] sm:$0xff]
    %v408 = vld [vmem:[#allocation2 + $0x98] sm:$0xff]
    %v409 = vld [vmem:[#allocation2 + $0xa0] sm:$0xff]
    %v410 = vld [vmem:[#allocation2 + $0xa8] sm:$0xff]
    %v411 = vld [vmem:[#allocation2 + $0xb0] sm:$0xff]
    %v412 = vld [vmem:[#allocation2 + $0xb8] sm:$0xff]
    %v413 = vld [vmem:[#allocation2 + $0xc0] sm:$0xff]
    %v414 = vld [vmem:[#allocation2 + $0xc8] sm:$0xff]
    %v415 = vld [vmem:[#allocation2 + $0xd0] sm:$0xff]
    %v416 = vld [vmem:[#allocation2 + $0xd8] sm:$0xff]
    %v417 = vld [vmem:[#allocation2 + $0xe0] sm:$0xff]
    %v418 = vld [vmem:[#allocation2 + $0xe8] sm:$0xff]
    %v419 = vld [vmem:[#allocation2 + $0xf0] sm:$0xff]
    %v420 = vld [vmem:[#allocation2 + $0xf8] sm:$0xff]
    %v421 = vld [vmem:[#allocation2 + $0x100] sm:$0xff]
    %v422 = vld [vmem:[#allocation2 + $0x108] sm:$0xff]
    %v423 = vld [vmem:[#allocation2 + $0x110] sm:$0xff]
    %v424 = vld [vmem:[#allocation2 + $0x118] sm:$0xff]
    %v425 = vld [vmem:[#allocation2 + $0x120] sm:$0xff]
    %v426 = vld [vmem:[#allocation2 + $0x128] sm:$0xff]
    %v427 = vld [vmem:[#allocation2 + $0x130] sm:$0xff]
    %v428 = vld [vmem:[#allocation2 + $0x138] sm:$0xff]
    %v429 = vld [vmem:[#allocation2 + $0x140] sm:$0xff]
    %v430 = vld [vmem:[#allocation2 + $0x148] sm:$0xff]
    %v431 = vld [vmem:[#allocation2 + $0x150] sm:$0xff]
    %v432 = vld [vmem:[#allocation2 + $0x158] sm:$0xff]
    %v433 = vld [vmem:[#allocation2 + $0x160] sm:$0xff]
    %v434 = vld [vmem:[#allocation2 + $0x168] sm:$0xff]
    %v435 = vld [vmem:[#allocation2 + $0x170] sm:$0xff]
    %v436 = vld [vmem:[#allocation2 + $0x178] sm:$0xff]
    %v437 = vld [vmem:[#allocation2 + $0x180] sm:$0xff]
    %v438 = vld [vmem:[#allocation2 + $0x188] sm:$0xff]
    %v439 = vld [vmem:[#allocation2 + $0x190] sm:$0xff]
    %v440 = vld [vmem:[#allocation2 + $0x198] sm:$0xff]
    %v441 = vld [vmem:[#allocation2 + $0x1a0] sm:$0xff]
    %v442 = vld [vmem:[#allocation2 + $0x1a8] sm:$0xff]
    %v443 = vld [vmem:[#allocation2 + $0x1b0] sm:$0xff]
    %v444 = vld [vmem:[#allocation2 + $0x1b8] sm:$0xff]
    %v445 = vld [vmem:[#allocation2 + $0x1c0] sm:$0xff]
    %v446 = vld [vmem:[#allocation2 + $0x1c8] sm:$0xff]
    %v447 = vld [vmem:[#allocation2 + $0x1d0] sm:$0xff]
    %v448 = vld [vmem:[#allocation2 + $0x1d8] sm:$0xff]
    %v449 = vld [vmem:[#allocation2 + $0x1e0] sm:$0xff]
    %v450 = vld [vmem:[#allocation2 + $0x1e8] sm:$0xff]
    %v451 = vld [vmem:[#allocation2 + $0x1f0] sm:$0xff]
    %v452 = vld [vmem:[#allocation2 + $0x1f8] sm:$0xff]
    %v453 = vpack.c.bf16 %v383, %v383
    %v454 = vpack.c.bf16 %v384, %v384
    %s455 = scalar_lea.vmem %s5, 6
    %v456 = vld [vmem:[%s455] ss:$8 sm:$0xf]
    %v458 = vperm.slane %v456, 0
    %v459 = vperm.slane %v456, 1
    %v460 = vperm.slane %v456, 2
    %v461 = vperm.slane %v456, 3
    %v530 = vunpack.c.l.b16 %v389
    %v531 = vunpack.c.h.b16 %v389
    %v532 = vunpack.c.l.b16 %v390
    %v533 = vunpack.c.h.b16 %v390
    %v534 = vunpack.c.l.b16 %v391
    %v535 = vunpack.c.h.b16 %v391
    %v536 = vunpack.c.l.b16 %v392
    %v537 = vunpack.c.h.b16 %v392
    %v538 = vunpack.c.l.b16 %v393
    %v539 = vunpack.c.h.b16 %v393
    %v540 = vunpack.c.l.b16 %v394
    %v541 = vunpack.c.h.b16 %v394
    %v542 = vunpack.c.l.b16 %v395
    %v543 = vunpack.c.h.b16 %v395
    %v544 = vunpack.c.l.b16 %v396
    %v545 = vunpack.c.h.b16 %v396
    %v546 = vunpack.c.l.b16 %v397
    %v547 = vunpack.c.h.b16 %v397
    %v548 = vunpack.c.l.b16 %v398
    %v549 = vunpack.c.h.b16 %v398
    %v550 = vunpack.c.l.b16 %v399
    %v551 = vunpack.c.h.b16 %v399
    %v552 = vunpack.c.l.b16 %v400
    %v553 = vunpack.c.h.b16 %v400
    %v554 = vunpack.c.l.b16 %v401
    %v555 = vunpack.c.h.b16 %v401
    %v556 = vunpack.c.l.b16 %v402
    %v557 = vunpack.c.h.b16 %v402
    %v558 = vunpack.c.l.b16 %v403
    %v559 = vunpack.c.h.b16 %v403
    %v560 = vunpack.c.l.b16 %v404
    %v561 = vunpack.c.h.b16 %v404
    %v562 = vunpack.c.l.b16 %v405
    %v563 = vunpack.c.h.b16 %v405
    %v564 = vunpack.c.l.b16 %v406
    %v565 = vunpack.c.h.b16 %v406
    %v566 = vunpack.c.l.b16 %v407
    %v567 = vunpack.c.h.b16 %v407
    %v568 = vunpack.c.l.b16 %v408
    %v569 = vunpack.c.h.b16 %v408
    %v570 = vunpack.c.l.b16 %v409
    %v571 = vunpack.c.h.b16 %v409
    %v572 = vunpack.c.l.b16 %v410
    %v573 = vunpack.c.h.b16 %v410
    %v574 = vunpack.c.l.b16 %v411
    %v575 = vunpack.c.h.b16 %v411
    %v576 = vunpack.c.l.b16 %v412
    %v577 = vunpack.c.h.b16 %v412
    %v578 = vunpack.c.l.b16 %v413
    %v579 = vunpack.c.h.b16 %v413
    %v580 = vunpack.c.l.b16 %v414
    %v581 = vunpack.c.h.b16 %v414
    %v582 = vunpack.c.l.b16 %v415
    %v583 = vunpack.c.h.b16 %v415
    %v584 = vunpack.c.l.b16 %v416
    %v585 = vunpack.c.h.b16 %v416
    %v586 = vunpack.c.l.b16 %v417
    %v587 = vunpack.c.h.b16 %v417
    %v588 = vunpack.c.l.b16 %v418
    %v589 = vunpack.c.h.b16 %v418
    %v590 = vunpack.c.l.b16 %v419
    %v591 = vunpack.c.h.b16 %v419
    %v592 = vunpack.c.l.b16 %v420
    %v593 = vunpack.c.h.b16 %v420
    %v594 = vunpack.c.l.b16 %v421
    %v595 = vunpack.c.h.b16 %v421
    %v596 = vunpack.c.l.b16 %v422
    %v597 = vunpack.c.h.b16 %v422
    %v598 = vunpack.c.l.b16 %v423
    %v599 = vunpack.c.h.b16 %v423
    %v600 = vunpack.c.l.b16 %v424
    %v601 = vunpack.c.h.b16 %v424
    %v602 = vunpack.c.l.b16 %v425
    %v603 = vunpack.c.h.b16 %v425
    %v604 = vunpack.c.l.b16 %v426
    %v605 = vunpack.c.h.b16 %v426
    %v606 = vunpack.c.l.b16 %v427
    %v607 = vunpack.c.h.b16 %v427
    %v608 = vunpack.c.l.b16 %v428
    %v609 = vunpack.c.h.b16 %v428
    %v610 = vunpack.c.l.b16 %v429
    %v611 = vunpack.c.h.b16 %v429
    %v612 = vunpack.c.l.b16 %v430
    %v613 = vunpack.c.h.b16 %v430
    %v614 = vunpack.c.l.b16 %v431
    %v615 = vunpack.c.h.b16 %v431
    %v616 = vunpack.c.l.b16 %v432
    %v617 = vunpack.c.h.b16 %v432
    %v618 = vunpack.c.l.b16 %v433
    %v619 = vunpack.c.h.b16 %v433
    %v620 = vunpack.c.l.b16 %v434
    %v621 = vunpack.c.h.b16 %v434
    %v622 = vunpack.c.l.b16 %v435
    %v623 = vunpack.c.h.b16 %v435
    %v624 = vunpack.c.l.b16 %v436
    %v625 = vunpack.c.h.b16 %v436
    %v626 = vunpack.c.l.b16 %v437
    %v627 = vunpack.c.h.b16 %v437
    %v628 = vunpack.c.l.b16 %v438
    %v629 = vunpack.c.h.b16 %v438
    %v630 = vunpack.c.l.b16 %v439
    %v631 = vunpack.c.h.b16 %v439
    %v632 = vunpack.c.l.b16 %v440
    %v633 = vunpack.c.h.b16 %v440
    %v634 = vunpack.c.l.b16 %v441
    %v635 = vunpack.c.h.b16 %v441
    %v636 = vunpack.c.l.b16 %v442
    %v637 = vunpack.c.h.b16 %v442
    %v638 = vunpack.c.l.b16 %v443
    %v639 = vunpack.c.h.b16 %v443
    %v640 = vunpack.c.l.b16 %v444
    %v641 = vunpack.c.h.b16 %v444
    %v642 = vunpack.c.l.b16 %v445
    %v643 = vunpack.c.h.b16 %v445
    %v644 = vunpack.c.l.b16 %v446
    %v645 = vunpack.c.h.b16 %v446
    %v646 = vunpack.c.l.b16 %v447
    %v647 = vunpack.c.h.b16 %v447
    %v648 = vunpack.c.l.b16 %v448
    %v649 = vunpack.c.h.b16 %v448
    %v650 = vunpack.c.l.b16 %v449
    %v651 = vunpack.c.h.b16 %v449
    %v652 = vunpack.c.l.b16 %v450
    %v653 = vunpack.c.h.b16 %v450
    %v654 = vunpack.c.l.b16 %v451
    %v655 = vunpack.c.h.b16 %v451
    %v656 = vunpack.c.l.b16 %v452
    %v657 = vunpack.c.h.b16 %v452
    %v658 = vpack.c.b16 %v534, %v530
    %v659 = vpack.c.b16 %v535, %v531
    %v660 = vpack.c.b16 %v536, %v532
    %v661 = vpack.c.b16 %v537, %v533
    %v662 = vpack.c.b16 %v542, %v538
    %v663 = vpack.c.b16 %v543, %v539
    %v664 = vpack.c.b16 %v544, %v540
    %v665 = vpack.c.b16 %v545, %v541
    %v666 = vpack.c.b16 %v550, %v546
    %v667 = vpack.c.b16 %v551, %v547
    %v668 = vpack.c.b16 %v552, %v548
    %v669 = vpack.c.b16 %v553, %v549
    %v670 = vpack.c.b16 %v558, %v554
    %v671 = vpack.c.b16 %v559, %v555
    %v672 = vpack.c.b16 %v560, %v556
    %v673 = vpack.c.b16 %v561, %v557
    %v674 = vpack.c.b16 %v566, %v562
    %v675 = vpack.c.b16 %v567, %v563
    %v676 = vpack.c.b16 %v568, %v564
    %v677 = vpack.c.b16 %v569, %v565
    %v678 = vpack.c.b16 %v574, %v570
    %v679 = vpack.c.b16 %v575, %v571
    %v680 = vpack.c.b16 %v576, %v572
    %v681 = vpack.c.b16 %v577, %v573
    %v682 = vpack.c.b16 %v582, %v578
    %v683 = vpack.c.b16 %v583, %v579
    %v684 = vpack.c.b16 %v584, %v580
    %v685 = vpack.c.b16 %v585, %v581
    %v686 = vpack.c.b16 %v590, %v586
    %v687 = vpack.c.b16 %v591, %v587
    %v688 = vpack.c.b16 %v592, %v588
    %v689 = vpack.c.b16 %v593, %v589
    %v690 = vpack.c.b16 %v598, %v594
    %v691 = vpack.c.b16 %v599, %v595
    %v692 = vpack.c.b16 %v600, %v596
    %v693 = vpack.c.b16 %v601, %v597
    %v694 = vpack.c.b16 %v606, %v602
    %v695 = vpack.c.b16 %v607, %v603
    %v696 = vpack.c.b16 %v608, %v604
    %v697 = vpack.c.b16 %v609, %v605
    %v698 = vpack.c.b16 %v614, %v610
    %v699 = vpack.c.b16 %v615, %v611
    %v700 = vpack.c.b16 %v616, %v612
    %v701 = vpack.c.b16 %v617, %v613
    %v702 = vpack.c.b16 %v622, %v618
    %v703 = vpack.c.b16 %v623, %v619
    %v704 = vpack.c.b16 %v624, %v620
    %v705 = vpack.c.b16 %v625, %v621
    %v706 = vpack.c.b16 %v630, %v626
    %v707 = vpack.c.b16 %v631, %v627
    %v708 = vpack.c.b16 %v632, %v628
    %v709 = vpack.c.b16 %v633, %v629
    %v710 = vpack.c.b16 %v638, %v634
    %v711 = vpack.c.b16 %v639, %v635
    %v712 = vpack.c.b16 %v640, %v636
    %v713 = vpack.c.b16 %v641, %v637
    %v714 = vpack.c.b16 %v646, %v642
    %v715 = vpack.c.b16 %v647, %v643
    %v716 = vpack.c.b16 %v648, %v644
    %v717 = vpack.c.b16 %v649, %v645
    %v718 = vpack.c.b16 %v654, %v650
    %v719 = vpack.c.b16 %v655, %v651
    %v720 = vpack.c.b16 %v656, %v652
    %v721 = vpack.c.b16 %v657, %v653
    %786 = vmatpush.bf16.msra.mxu0 %v686
    %787 = vmatpush.bf16.msra.mxu0 %v682
    %788 = vmatpush.bf16.msra.mxu0 %v678
    %789 = vmatpush.bf16.msra.mxu0 %v674
    %790 = vmatpush.bf16.msra.mxu0 %v670
    %791 = vmatpush.bf16.msra.mxu0 %v666
    %792 = vmatpush.bf16.msra.mxu0 %v662
    %793 = vmatpush.bf16.msra.mxu0 %v658
    %794 = vmatmul.bf16.gmra.mxu0 %v453
    %v795 = vpop.f32.mrf.mxu0
    %v796 = vadd.f32 %v458, %v795
    %v797 = vpop.f32.mrf.mxu0
    %798 = vdwg.mxu0
    %799 = vmatpush.bf16.msra.mxu0 %v718
    %800 = vmatpush.bf16.msra.mxu0 %v714
    %801 = vmatpush.bf16.msra.mxu0 %v710
    %802 = vmatpush.bf16.msra.mxu0 %v706
    %803 = vmatpush.bf16.msra.mxu0 %v702
    %804 = vmatpush.bf16.msra.mxu0 %v698
    %805 = vmatpush.bf16.msra.mxu0 %v694
    %806 = vmatpush.bf16.msra.mxu0 %v690
    %807 = vmatmul.bf16.gmra.mxu0 %v454
    %v808 = vpop.f32.mrf.mxu0
    %v809 = vadd.f32 %v796, %v808
    %v810 = vpop.f32.mrf.mxu0
    %811 = vdwg.mxu0
    %812 = vmatpush.bf16.msra.mxu0 %v687
    %813 = vmatpush.bf16.msra.mxu0 %v683
    %814 = vmatpush.bf16.msra.mxu0 %v679
    %815 = vmatpush.bf16.msra.mxu0 %v675
    %816 = vmatpush.bf16.msra.mxu0 %v671
    %817 = vmatpush.bf16.msra.mxu0 %v667
    %818 = vmatpush.bf16.msra.mxu0 %v663
    %819 = vmatpush.bf16.msra.mxu0 %v659
    %820 = vmatmul.bf16.gmra.mxu0 %v453
    %v821 = vpop.f32.mrf.mxu0
    %v822 = vadd.f32 %v459, %v821
    %v823 = vpop.f32.mrf.mxu0
    %824 = vdwg.mxu0
    %825 = vmatpush.bf16.msra.mxu0 %v719
    %826 = vmatpush.bf16.msra.mxu0 %v715
    %827 = vmatpush.bf16.msra.mxu0 %v711
    %828 = vmatpush.bf16.msra.mxu0 %v707
    %829 = vmatpush.bf16.msra.mxu0 %v703
    %830 = vmatpush.bf16.msra.mxu0 %v699
    %831 = vmatpush.bf16.msra.mxu0 %v695
    %832 = vmatpush.bf16.msra.mxu0 %v691
    %833 = vmatmul.bf16.gmra.mxu0 %v454
    %v834 = vpop.f32.mrf.mxu0
    %v835 = vadd.f32 %v822, %v834
    %v836 = vpop.f32.mrf.mxu0
    %837 = vdwg.mxu0
    %838 = vmatpush.bf16.msra.mxu0 %v688
    %839 = vmatpush.bf16.msra.mxu0 %v684
    %840 = vmatpush.bf16.msra.mxu0 %v680
    %841 = vmatpush.bf16.msra.mxu0 %v676
    %842 = vmatpush.bf16.msra.mxu0 %v672
    %843 = vmatpush.bf16.msra.mxu0 %v668
    %844 = vmatpush.bf16.msra.mxu0 %v664
    %845 = vmatpush.bf16.msra.mxu0 %v660
    %846 = vmatmul.bf16.gmra.mxu0 %v453
    %v847 = vpop.f32.mrf.mxu0
    %v848 = vadd.f32 %v460, %v847
    %v849 = vpop.f32.mrf.mxu0
    %850 = vdwg.mxu0
    %851 = vmatpush.bf16.msra.mxu0 %v720
    %852 = vmatpush.bf16.msra.mxu0 %v716
    %853 = vmatpush.bf16.msra.mxu0 %v712
    %854 = vmatpush.bf16.msra.mxu0 %v708
    %855 = vmatpush.bf16.msra.mxu0 %v704
    %856 = vmatpush.bf16.msra.mxu0 %v700
    %857 = vmatpush.bf16.msra.mxu0 %v696
    %858 = vmatpush.bf16.msra.mxu0 %v692
    %859 = vmatmul.bf16.gmra.mxu0 %v454
    %v860 = vpop.f32.mrf.mxu0
    %v861 = vadd.f32 %v848, %v860
    %v862 = vpop.f32.mrf.mxu0
    %863 = vdwg.mxu0
    %864 = vmatpush.bf16.msra.mxu0 %v689
    %865 = vmatpush.bf16.msra.mxu0 %v685
    %866 = vmatpush.bf16.msra.mxu0 %v681
    %867 = vmatpush.bf16.msra.mxu0 %v677
    %868 = vmatpush.bf16.msra.mxu0 %v673
    %869 = vmatpush.bf16.msra.mxu0 %v669
    %870 = vmatpush.bf16.msra.mxu0 %v665
    %871 = vmatpush.bf16.msra.mxu0 %v661
    %872 = vmatmul.bf16.gmra.mxu0 %v453
    %v873 = vpop.f32.mrf.mxu0
    %v874 = vadd.f32 %v461, %v873
    %v875 = vpop.f32.mrf.mxu0
    %876 = vdwg.mxu0
    %877 = vmatpush.bf16.msra.mxu0 %v721
    %878 = vmatpush.bf16.msra.mxu0 %v717
    %879 = vmatpush.bf16.msra.mxu0 %v713
    %880 = vmatpush.bf16.msra.mxu0 %v709
    %881 = vmatpush.bf16.msra.mxu0 %v705
    %882 = vmatpush.bf16.msra.mxu0 %v701
    %883 = vmatpush.bf16.msra.mxu0 %v697
    %884 = vmatpush.bf16.msra.mxu0 %v693
    %885 = vmatmul.bf16.gmra.mxu0 %v454
    %v886 = vpop.f32.mrf.mxu0
    %v887 = vadd.f32 %v874, %v886
    %v888 = vpop.f32.mrf.mxu0
    %889 = vdwg.mxu0
    %s890 = scalar_lea.vmem %s5, 7
    %v891 = vld [vmem:[%s890] ss:$8 sm:$0xf]
    %s892 = scalar_lea.vmem %s5, 32
    %v893 = vld [vmem:[%s892] ss:$8 sm:$0xf]
    %v894 = vrot.slane %v809, 4
    %v895 = vadd.f32 %v809, %v894
    %v896 = vrot.slane %v895, 2
    %v897 = vadd.f32 %v895, %v896
    %v898 = vrot.slane %v897, 1
    %v899 = vadd.f32 %v897, %v898
    %v900 = vrot.slane %v835, 4
    %v901 = vadd.f32 %v835, %v900
    %v902 = vrot.slane %v901, 2
    %v903 = vadd.f32 %v901, %v902
    %v904 = vrot.slane %v903, 1
    %v905 = vadd.f32 %v903, %v904
    %v906 = vrot.slane %v861, 4
    %v907 = vadd.f32 %v861, %v906
    %v908 = vrot.slane %v907, 2
    %v909 = vadd.f32 %v907, %v908
    %v910 = vrot.slane %v909, 1
    %v911 = vadd.f32 %v909, %v910
    %v912 = vrot.slane %v887, 4
    %v913 = vadd.f32 %v887, %v912
    %v914 = vrot.slane %v913, 2
    %v915 = vadd.f32 %v913, %v914
    %v916 = vrot.slane %v915, 1
    %v917 = vadd.f32 %v915, %v916
    %v918 = vmul.f32 %v899, %v132
    %v919 = vmul.f32 %v905, %v132
    %v920 = vmul.f32 %v911, %v132
    %v921 = vmul.f32 %v917, %v132
    %v922 = vmul.f32 %v809, %v809
    %v923 = vmul.f32 %v835, %v835
    %v924 = vmul.f32 %v861, %v861
    %v925 = vmul.f32 %v887, %v887
    %v926 = vrot.slane %v922, 4
    %v927 = vadd.f32 %v922, %v926
    %v928 = vrot.slane %v927, 2
    %v929 = vadd.f32 %v927, %v928
    %v930 = vrot.slane %v929, 1
    %v931 = vadd.f32 %v929, %v930
    %v932 = vrot.slane %v923, 4
    %v933 = vadd.f32 %v923, %v932
    %v934 = vrot.slane %v933, 2
    %v935 = vadd.f32 %v933, %v934
    %v936 = vrot.slane %v935, 1
    %v937 = vadd.f32 %v935, %v936
    %v938 = vrot.slane %v924, 4
    %v939 = vadd.f32 %v924, %v938
    %v940 = vrot.slane %v939, 2
    %v941 = vadd.f32 %v939, %v940
    %v942 = vrot.slane %v941, 1
    %v943 = vadd.f32 %v941, %v942
    %v944 = vrot.slane %v925, 4
    %v945 = vadd.f32 %v925, %v944
    %v946 = vrot.slane %v945, 2
    %v947 = vadd.f32 %v945, %v946
    %v948 = vrot.slane %v947, 1
    %v949 = vadd.f32 %v947, %v948
    %v950 = vmul.f32 %v931, %v132
    %v951 = vmul.f32 %v937, %v132
    %v952 = vmul.f32 %v943, %v132
    %v953 = vmul.f32 %v949, %v132
    %v954 = vmul.f32 %v918, %v918
    %v955 = vmul.f32 %v919, %v919
    %v956 = vmul.f32 %v920, %v920
    %v957 = vmul.f32 %v921, %v921
    %v958 = vsub.f32 %v950, %v954
    %v959 = vsub.f32 %v951, %v955
    %v960 = vsub.f32 %v952, %v956
    %v961 = vsub.f32 %v953, %v957
    %v962 = vmax.f32 %v958, 0.0
    %v963 = vmax.f32 %v959, 0.0
    %v964 = vmax.f32 %v960, 0.0
    %v965 = vmax.f32 %v961, 0.0
    %v966 = vadd.f32 %v962, 1e-05
    %v967 = vadd.f32 %v963, 1e-05
    %v968 = vadd.f32 %v964, 1e-05
    %v969 = vadd.f32 %v965, 1e-05
    %v970 = vrsqrt.pop %v966
    %v971 = vmul.f32 %v970, %v966
    %v972 = vmul.f32 %v971, %v970
    %v973 = vmul.f32 0.5, %v972
    %v974 = vsub.f32 1.5, %v973
    %v975 = vmul.f32 %v970, %v974
    %vm976 = vweird.f32 %v966
    %vm977 = vweird.f32 %v970
    %vm978 = vmor %vm976, %vm977
    %v979 = vsel %vm978, %v970, %v975
    %v980 = vrsqrt.pop %v967
    %v981 = vmul.f32 %v980, %v967
    %v982 = vmul.f32 %v981, %v980
    %v983 = vmul.f32 0.5, %v982
    %v984 = vsub.f32 1.5, %v983
    %v985 = vmul.f32 %v980, %v984
    %vm986 = vweird.f32 %v967
    %vm987 = vweird.f32 %v980
    %vm988 = vmor %vm986, %vm987
    %v989 = vsel %vm988, %v980, %v985
    %v990 = vrsqrt.pop %v968
    %v991 = vmul.f32 %v990, %v968
    %v992 = vmul.f32 %v991, %v990
    %v993 = vmul.f32 0.5, %v992
    %v994 = vsub.f32 1.5, %v993
    %v995 = vmul.f32 %v990, %v994
    %vm996 = vweird.f32 %v968
    %vm997 = vweird.f32 %v990
    %vm998 = vmor %vm996, %vm997
    %v999 = vsel %vm998, %v990, %v995
    %v1000 = vrsqrt.pop %v969
    %v1001 = vmul.f32 %v1000, %v969
    %v1002 = vmul.f32 %v1001, %v1000
    %v1003 = vmul.f32 0.5, %v1002
    %v1004 = vsub.f32 1.5, %v1003
    %v1005 = vmul.f32 %v1000, %v1004
    %vm1006 = vweird.f32 %v969
    %vm1007 = vweird.f32 %v1000
    %vm1008 = vmor %vm1006, %vm1007
    %v1009 = vsel %vm1008, %v1000, %v1005
    %v1014 = vrot.slane %v989, 7
    %v1015 = vrot.slane %v999, 6
    %v1016 = vrot.slane %v1009, 5
    %v1017 = vsel %vm357, %v979, %v1014
    %vm1018 = vcmask 1042434
    %v1019 = vsel %vm1018, %v1015, %v1016
    %vm1020 = vcmask 1041408
    %v1021 = vsel %vm1020, %v1017, %v1019
    %v1023 = vmul.f32 %v891, %v1021
    %v1025 = vperm.slane %v1023, 0
    %v1026 = vperm.slane %v1023, 1
    %v1027 = vperm.slane %v1023, 2
    %v1028 = vperm.slane %v1023, 3
    %v1033 = vmul.f32 %v918, %v1025
    %v1034 = vmul.f32 %v919, %v1026
    %v1035 = vmul.f32 %v920, %v1027
    %v1036 = vmul.f32 %v921, %v1028
    %v1041 = vrot.slane %v1034, 7
    %v1042 = vrot.slane %v1035, 6
    %v1043 = vrot.slane %v1036, 5
    %v1044 = vsel %vm357, %v1033, %v1041
    %v1045 = vsel %vm1018, %v1042, %v1043
    %v1046 = vsel %vm1020, %v1044, %v1045
    %v1048 = vsub.f32 %v893, %v1046
    %v1049 = vmul.f32 %v809, %v1025
    %v1050 = vmul.f32 %v835, %v1026
    %v1051 = vmul.f32 %v861, %v1027
    %v1052 = vmul.f32 %v887, %v1028
    %v1054 = vperm.slane %v1048, 0
    %v1055 = vperm.slane %v1048, 1
    %v1056 = vperm.slane %v1048, 2
    %v1057 = vperm.slane %v1048, 3
    %v1062 = vadd.f32 %v1049, %v1054
    %v1063 = vadd.f32 %v1050, %v1055
    %v1064 = vadd.f32 %v1051, %v1056
    %v1065 = vadd.f32 %v1052, %v1057
    %v1066 = vmax.f32 %v1062, 0.0
    %v1067 = vmax.f32 %v1063, 0.0
    %v1068 = vmax.f32 %v1064, 0.0
    %v1069 = vmax.f32 %v1065, 0.0
    %v1070 = vld [vmem:[#allocation4] sm:$0xf]
    %v1071 = vld [vmem:[#allocation4 + $0x4] sm:$0xf]
    %v1072 = vld [vmem:[#allocation4 + $0x8] sm:$0xf]
    %v1073 = vld [vmem:[#allocation4 + $0xc] sm:$0xf]
    %v1074 = vld [vmem:[#allocation4 + $0x10] sm:$0xf]
    %v1075 = vld [vmem:[#allocation4 + $0x14] sm:$0xf]
    %v1076 = vld [vmem:[#allocation4 + $0x18] sm:$0xf]
    %v1077 = vld [vmem:[#allocation4 + $0x1c] sm:$0xf]
    %v1078 = vld [vmem:[#allocation4 + $0x20] sm:$0xf]
    %v1079 = vld [vmem:[#allocation4 + $0x24] sm:$0xf]
    %v1080 = vld [vmem:[#allocation4 + $0x28] sm:$0xf]
    %v1081 = vld [vmem:[#allocation4 + $0x2c] sm:$0xf]
    %v1082 = vld [vmem:[#allocation4 + $0x30] sm:$0xf]
    %v1083 = vld [vmem:[#allocation4 + $0x34] sm:$0xf]
    %v1084 = vld [vmem:[#allocation4 + $0x38] sm:$0xf]
    %v1085 = vld [vmem:[#allocation4 + $0x3c] sm:$0xf]
    %v1086 = vld [vmem:[#allocation4 + $0x40] sm:$0xf]
    %v1087 = vld [vmem:[#allocation4 + $0x44] sm:$0xf]
    %v1088 = vld [vmem:[#allocation4 + $0x48] sm:$0xf]
    %v1089 = vld [vmem:[#allocation4 + $0x4c] sm:$0xf]
    %v1090 = vld [vmem:[#allocation4 + $0x50] sm:$0xf]
    %v1091 = vld [vmem:[#allocation4 + $0x54] sm:$0xf]
    %v1092 = vld [vmem:[#allocation4 + $0x58] sm:$0xf]
    %v1093 = vld [vmem:[#allocation4 + $0x5c] sm:$0xf]
    %v1094 = vld [vmem:[#allocation4 + $0x60] sm:$0xf]
    %v1095 = vld [vmem:[#allocation4 + $0x64] sm:$0xf]
    %v1096 = vld [vmem:[#allocation4 + $0x68] sm:$0xf]
    %v1097 = vld [vmem:[#allocation4 + $0x6c] sm:$0xf]
    %v1098 = vld [vmem:[#allocation4 + $0x70] sm:$0xf]
    %v1099 = vld [vmem:[#allocation4 + $0x74] sm:$0xf]
    %v1100 = vld [vmem:[#allocation4 + $0x78] sm:$0xf]
    %v1101 = vld [vmem:[#allocation4 + $0x7c] sm:$0xf]
    %v1102 = vld [vmem:[#allocation4 + $0x80] sm:$0xf]
    %v1103 = vld [vmem:[#allocation4 + $0x84] sm:$0xf]
    %v1104 = vld [vmem:[#allocation4 + $0x88] sm:$0xf]
    %v1105 = vld [vmem:[#allocation4 + $0x8c] sm:$0xf]
    %v1106 = vld [vmem:[#allocation4 + $0x90] sm:$0xf]
    %v1107 = vld [vmem:[#allocation4 + $0x94] sm:$0xf]
    %v1108 = vld [vmem:[#allocation4 + $0x98] sm:$0xf]
    %v1109 = vld [vmem:[#allocation4 + $0x9c] sm:$0xf]
    %v1110 = vld [vmem:[#allocation4 + $0xa0] sm:$0xf]
    %v1111 = vld [vmem:[#allocation4 + $0xa4] sm:$0xf]
    %v1112 = vld [vmem:[#allocation4 + $0xa8] sm:$0xf]
    %v1113 = vld [vmem:[#allocation4 + $0xac] sm:$0xf]
    %v1114 = vld [vmem:[#allocation4 + $0xb0] sm:$0xf]
    %v1115 = vld [vmem:[#allocation4 + $0xb4] sm:$0xf]
    %v1116 = vld [vmem:[#allocation4 + $0xb8] sm:$0xf]
    %v1117 = vld [vmem:[#allocation4 + $0xbc] sm:$0xf]
    %v1118 = vld [vmem:[#allocation4 + $0xc0] sm:$0xf]
    %v1119 = vld [vmem:[#allocation4 + $0xc4] sm:$0xf]
    %v1120 = vld [vmem:[#allocation4 + $0xc8] sm:$0xf]
    %v1121 = vld [vmem:[#allocation4 + $0xcc] sm:$0xf]
    %v1122 = vld [vmem:[#allocation4 + $0xd0] sm:$0xf]
    %v1123 = vld [vmem:[#allocation4 + $0xd4] sm:$0xf]
    %v1124 = vld [vmem:[#allocation4 + $0xd8] sm:$0xf]
    %v1125 = vld [vmem:[#allocation4 + $0xdc] sm:$0xf]
    %v1126 = vld [vmem:[#allocation4 + $0xe0] sm:$0xf]
    %v1127 = vld [vmem:[#allocation4 + $0xe4] sm:$0xf]
    %v1128 = vld [vmem:[#allocation4 + $0xe8] sm:$0xf]
    %v1129 = vld [vmem:[#allocation4 + $0xec] sm:$0xf]
    %v1130 = vld [vmem:[#allocation4 + $0xf0] sm:$0xf]
    %v1131 = vld [vmem:[#allocation4 + $0xf4] sm:$0xf]
    %v1132 = vld [vmem:[#allocation4 + $0xf8] sm:$0xf]
    %v1133 = vld [vmem:[#allocation4 + $0xfc] sm:$0xf]
    %v1134 = vpack.c.bf16 %v1066, %v1066
    %v1135 = vpack.c.bf16 %v1067, %v1067
    %v1136 = vpack.c.bf16 %v1068, %v1068
    %v1137 = vpack.c.bf16 %v1069, %v1069
    %v1138 = vld [vmem:[%s5 + $0x21] ss:$0 sm:$0xff]
    %v1203 = vunpack.c.l.b16 %v1070
    %v1204 = vunpack.c.l.b16 %v1071
    %v1205 = vunpack.c.l.b16 %v1072
    %v1206 = vunpack.c.l.b16 %v1073
    %v1207 = vunpack.c.l.b16 %v1074
    %v1208 = vunpack.c.l.b16 %v1075
    %v1209 = vunpack.c.l.b16 %v1076
    %v1210 = vunpack.c.l.b16 %v1077
    %v1211 = vunpack.c.l.b16 %v1078
    %v1212 = vunpack.c.l.b16 %v1079
    %v1213 = vunpack.c.l.b16 %v1080
    %v1214 = vunpack.c.l.b16 %v1081
    %v1215 = vunpack.c.l.b16 %v1082
    %v1216 = vunpack.c.l.b16 %v1083
    %v1217 = vunpack.c.l.b16 %v1084
    %v1218 = vunpack.c.l.b16 %v1085
    %v1219 = vunpack.c.l.b16 %v1086
    %v1220 = vunpack.c.l.b16 %v1087
    %v1221 = vunpack.c.l.b16 %v1088
    %v1222 = vunpack.c.l.b16 %v1089
    %v1223 = vunpack.c.l.b16 %v1090
    %v1224 = vunpack.c.l.b16 %v1091
    %v1225 = vunpack.c.l.b16 %v1092
    %v1226 = vunpack.c.l.b16 %v1093
    %v1227 = vunpack.c.l.b16 %v1094
    %v1228 = vunpack.c.l.b16 %v1095
    %v1229 = vunpack.c.l.b16 %v1096
    %v1230 = vunpack.c.l.b16 %v1097
    %v1231 = vunpack.c.l.b16 %v1098
    %v1232 = vunpack.c.l.b16 %v1099
    %v1233 = vunpack.c.l.b16 %v1100
    %v1234 = vunpack.c.l.b16 %v1101
    %v1235 = vunpack.c.l.b16 %v1102
    %v1236 = vunpack.c.l.b16 %v1103
    %v1237 = vunpack.c.l.b16 %v1104
    %v1238 = vunpack.c.l.b16 %v1105
    %v1239 = vunpack.c.l.b16 %v1106
    %v1240 = vunpack.c.l.b16 %v1107
    %v1241 = vunpack.c.l.b16 %v1108
    %v1242 = vunpack.c.l.b16 %v1109
    %v1243 = vunpack.c.l.b16 %v1110
    %v1244 = vunpack.c.l.b16 %v1111
    %v1245 = vunpack.c.l.b16 %v1112
    %v1246 = vunpack.c.l.b16 %v1113
    %v1247 = vunpack.c.l.b16 %v1114
    %v1248 = vunpack.c.l.b16 %v1115
    %v1249 = vunpack.c.l.b16 %v1116
    %v1250 = vunpack.c.l.b16 %v1117
    %v1251 = vunpack.c.l.b16 %v1118
    %v1252 = vunpack.c.l.b16 %v1119
    %v1253 = vunpack.c.l.b16 %v1120
    %v1254 = vunpack.c.l.b16 %v1121
    %v1255 = vunpack.c.l.b16 %v1122
    %v1256 = vunpack.c.l.b16 %v1123
    %v1257 = vunpack.c.l.b16 %v1124
    %v1258 = vunpack.c.l.b16 %v1125
    %v1259 = vunpack.c.l.b16 %v1126
    %v1260 = vunpack.c.l.b16 %v1127
    %v1261 = vunpack.c.l.b16 %v1128
    %v1262 = vunpack.c.l.b16 %v1129
    %v1263 = vunpack.c.l.b16 %v1130
    %v1264 = vunpack.c.l.b16 %v1131
    %v1265 = vunpack.c.l.b16 %v1132
    %v1266 = vunpack.c.l.b16 %v1133
    %v1267 = vpack.c.b16 %v1204, %v1203
    %v1268 = vpack.c.b16 %v1206, %v1205
    %v1269 = vpack.c.b16 %v1208, %v1207
    %v1270 = vpack.c.b16 %v1210, %v1209
    %v1271 = vpack.c.b16 %v1212, %v1211
    %v1272 = vpack.c.b16 %v1214, %v1213
    %v1273 = vpack.c.b16 %v1216, %v1215
    %v1274 = vpack.c.b16 %v1218, %v1217
    %v1275 = vpack.c.b16 %v1220, %v1219
    %v1276 = vpack.c.b16 %v1222, %v1221
    %v1277 = vpack.c.b16 %v1224, %v1223
    %v1278 = vpack.c.b16 %v1226, %v1225
    %v1279 = vpack.c.b16 %v1228, %v1227
    %v1280 = vpack.c.b16 %v1230, %v1229
    %v1281 = vpack.c.b16 %v1232, %v1231
    %v1282 = vpack.c.b16 %v1234, %v1233
    %v1283 = vpack.c.b16 %v1236, %v1235
    %v1284 = vpack.c.b16 %v1238, %v1237
    %v1285 = vpack.c.b16 %v1240, %v1239
    %v1286 = vpack.c.b16 %v1242, %v1241
    %v1287 = vpack.c.b16 %v1244, %v1243
    %v1288 = vpack.c.b16 %v1246, %v1245
    %v1289 = vpack.c.b16 %v1248, %v1247
    %v1290 = vpack.c.b16 %v1250, %v1249
    %v1291 = vpack.c.b16 %v1252, %v1251
    %v1292 = vpack.c.b16 %v1254, %v1253
    %v1293 = vpack.c.b16 %v1256, %v1255
    %v1294 = vpack.c.b16 %v1258, %v1257
    %v1295 = vpack.c.b16 %v1260, %v1259
    %v1296 = vpack.c.b16 %v1262, %v1261
    %v1297 = vpack.c.b16 %v1264, %v1263
    %v1298 = vpack.c.b16 %v1266, %v1265
    %1331 = vmatpush.bf16.msra.mxu0 %v1274
    %1332 = vmatpush.bf16.msra.mxu0 %v1273
    %1333 = vmatpush.bf16.msra.mxu0 %v1272
    %1334 = vmatpush.bf16.msra.mxu0 %v1271
    %1335 = vmatpush.bf16.msra.mxu0 %v1270
    %1336 = vmatpush.bf16.msra.mxu0 %v1269
    %1337 = vmatpush.bf16.msra.mxu0 %v1268
    %1338 = vmatpush.bf16.msra.mxu0 %v1267
    %1339 = vmatmul.bf16.gmra.mxu0 %v1134
    %v1340 = vpop.f32.mrf.mxu0
    %v1341 = vadd.f32 %v1138, %v1340
    %v1342 = vpop.f32.mrf.mxu0
    %1343 = vdwg.mxu0
    %1344 = vmatpush.bf16.msra.mxu0 %v1282
    %1345 = vmatpush.bf16.msra.mxu0 %v1281
    %1346 = vmatpush.bf16.msra.mxu0 %v1280
    %1347 = vmatpush.bf16.msra.mxu0 %v1279
    %1348 = vmatpush.bf16.msra.mxu0 %v1278
    %1349 = vmatpush.bf16.msra.mxu0 %v1277
    %1350 = vmatpush.bf16.msra.mxu0 %v1276
    %1351 = vmatpush.bf16.msra.mxu0 %v1275
    %1352 = vmatmul.bf16.gmra.mxu0 %v1135
    %v1353 = vpop.f32.mrf.mxu0
    %v1354 = vadd.f32 %v1341, %v1353
    %v1355 = vpop.f32.mrf.mxu0
    %1356 = vdwg.mxu0
    %1357 = vmatpush.bf16.msra.mxu0 %v1290
    %1358 = vmatpush.bf16.msra.mxu0 %v1289
    %1359 = vmatpush.bf16.msra.mxu0 %v1288
    %1360 = vmatpush.bf16.msra.mxu0 %v1287
    %1361 = vmatpush.bf16.msra.mxu0 %v1286
    %1362 = vmatpush.bf16.msra.mxu0 %v1285
    %1363 = vmatpush.bf16.msra.mxu0 %v1284
    %1364 = vmatpush.bf16.msra.mxu0 %v1283
    %1365 = vmatmul.bf16.gmra.mxu0 %v1136
    %v1366 = vpop.f32.mrf.mxu0
    %v1367 = vadd.f32 %v1354, %v1366
    %v1368 = vpop.f32.mrf.mxu0
    %1369 = vdwg.mxu0
    %1370 = vmatpush.bf16.msra.mxu0 %v1298
    %1371 = vmatpush.bf16.msra.mxu0 %v1297
    %1372 = vmatpush.bf16.msra.mxu0 %v1296
    %1373 = vmatpush.bf16.msra.mxu0 %v1295
    %1374 = vmatpush.bf16.msra.mxu0 %v1294
    %1375 = vmatpush.bf16.msra.mxu0 %v1293
    %1376 = vmatpush.bf16.msra.mxu0 %v1292
    %1377 = vmatpush.bf16.msra.mxu0 %v1291
    %1378 = vmatmul.bf16.gmra.mxu0 %v1137
    %v1379 = vpop.f32.mrf.mxu0
    %v1380 = vadd.f32 %v1367, %v1379
    %v1381 = vpop.f32.mrf.mxu0
    %1382 = vdwg.mxu0
    %vm1383 = vcmask 15360
    %1384 = vst.msk [vmem:[%s6] sm:$0xff] %vm1383, %v1380
    // Predicated region
    $region30: #{_lambda_.1} parent=1 // pred_check
      _
    $region31: #{_lambda_.1} parent=1 // pred_check_branch
      %1386 = sbr.rel (0) target = $region33
    $region32: #{_lambda_.1} parent=1 // pred_region
      _
    $region33: #{_lambda_.1} parent=1 // pred_fallthru
      _
    // Predicated region
    $region34: #{_lambda_.1} parent=1 // pred_check
      _
    $region35: #{_lambda_.1} parent=1 // pred_check_branch
      %1388 = sbr.rel (0) target = $region37
    $region36: #{_lambda_.1} parent=1 // pred_region
      _
    $region37: #{_lambda_.1} parent=1 // pred_fallthru
      _
    %1389 = vsyncpa [#allocation5], 1
  %1390 = vsyncmov [#allocation3]
  %s1391 = vpop.sfrf %1390
  %p1392 = scmp.eq.s32.totalorder %s1391, 0
  %p1393 = pneg %p1392
  %1395 = shalt.err (%p1393)

</llo_original>
